<compile_context>
chip_gen: v7x
topology: tpu7x:2x2x1
jax: 0.10.0
libtpu: 0.0.40
codegen_flags: <defaults>
</compile_context>

<pallas_src>
import functools

import jax
import jax.numpy as jnp
from jax import lax
from jax.experimental import pallas as pl
from jax.experimental.pallas import tpu as pltpu


def _pow_gamma(x, gamma):
    """(1 - pt) ** gamma with static gamma: prefer VPU square / integer_pow."""
    if float(gamma) == int(gamma):
        g = int(gamma)
        if g == 2:
            return jnp.square(x)
        return lax.integer_pow(x, g)
    return x ** gamma  # non-integer gamma: fall back to pow (EUP)


def _focal_kernel(logits_ref, label_ref, part_ref, *, alpha, gamma, ignore_lb):
    # logits_ref: (1, C, TL)   label_ref: (1, 1, TL)   part_ref: (1, 1, 8, 128)
    x = logits_ref[0].astype(jnp.float32)            # (C, TL)  channels on sublanes
    lbl = label_ref[0]                               # (1, TL)  int32

    valid = lbl != ignore_lb                          # (1, TL)
    lbl_clamped = jnp.where(valid, lbl, 0)            # label[ignore] = 0

    # softmax over the channel (sublane) axis
    m = jnp.max(x, axis=0, keepdims=True)             # (1, TL)
    e = jnp.exp(x - m)                                 # (C, TL)
    s = jnp.sum(e, axis=0, keepdims=True)              # (1, TL)
    probs = e * pl.reciprocal(s, approx=True)          # (C, TL)

    # one-hot of the label along the channel (sublane) axis
    ch_iota = lax.broadcasted_iota(jnp.int32, x.shape, 0)
    onehot = (ch_iota == lbl_clamped).astype(jnp.float32)   # (C, TL)

    pt = jnp.where(onehot == 1.0, probs, 1.0 - probs)
    alpha_t = alpha * onehot + (1.0 - alpha) * (1.0 - onehot)
    loss = -alpha_t * _pow_gamma(1.0 - pt, gamma) * jnp.log(pt + 1e-12)

    # zero out every channel of ignored (and padded) pixels
    loss = jnp.where(valid, loss, 0.0)

    part_sum = jnp.sum(loss)                           # per-block partial loss sum
    part_cnt = jnp.sum(valid.astype(jnp.float32))      # per-block valid-pixel count

    # pack the two partials into a lane-dense (8,128) output tile:
    # [0,0] = loss partial, [0,1] = count partial, rest zeros.
    r = lax.broadcasted_iota(jnp.int32, (8, 128), 0)
    c = lax.broadcasted_iota(jnp.int32, (8, 128), 1)
    blk = jnp.where((r == 0) & (c == 0), part_sum,
                    jnp.where((r == 0) & (c == 1), part_cnt, 0.0))
    part_ref[...] = blk[None, None]


def focal_loss_pallas(logits_nchw, label_nhw, *, alpha=0.25, gamma=2.0,
                      ignore_lb=255, tile_l=8192):
    N, C, H, W = logits_nchw.shape
    HW = H * W

    # Free reshapes only -- no transpose, no extra HBM round trip.
    x = logits_nchw.reshape(N, C, HW)
    lbl = label_nhw.reshape(N, 1, HW).astype(jnp.int32)

    # Spatial (lane) tile: multiple of 128, at most tile_l.
    tile_l = max(128, (int(tile_l) // 128) * 128)
    if HW <= tile_l:
        TL = pl.cdiv(HW, 128) * 128
    else:
        TL = tile_l
    HWp = pl.cdiv(HW, TL) * TL
    if HWp != HW:
        # pad spatial axis; padded labels = ignore_lb -> contribute nothing
        x = jnp.pad(x, ((0, 0), (0, 0), (0, HWp - HW)))
        lbl = jnp.pad(lbl, ((0, 0), (0, 0), (0, HWp - HW)),
                      constant_values=ignore_lb)
    LT = HWp // TL

    kern = functools.partial(_focal_kernel, alpha=float(alpha),
                             gamma=float(gamma), ignore_lb=int(ignore_lb))

    parts = pl.pallas_call(
        kern,
        out_shape=jax.ShapeDtypeStruct((N, LT, 8, 128), jnp.float32),
        grid_spec=pltpu.PrefetchScalarGridSpec(
            num_scalar_prefetch=0,
            grid=(N, LT),
            in_specs=[
                pl.BlockSpec((1, C, TL), lambda i, j: (i, 0, j)),
                pl.BlockSpec((1, 1, TL), lambda i, j: (i, 0, j)),
            ],
            out_specs=pl.BlockSpec((1, 1, 8, 128), lambda i, j: (i, j, 0, 0)),
        ),
        compiler_params=pltpu.CompilerParams(
            dimension_semantics=("parallel", "parallel")),
    )(x, lbl)

    loss_sum = jnp.sum(parts[:, :, 0, 0])
    n_valid = jnp.sum(parts[:, :, 0, 1])
    # reduction='mean' as in the torch module: total loss sum / n_valid
    # (no 0-division guard, faithful to the reference semantics).
    return loss_sum / n_valid


def focal_loss_ref(logits, label, *, alpha=0.25, gamma=2.0, ignore_lb=255):
    # pure-JAX reference mirroring the PyTorch forward
    valid = label != ignore_lb
    n_valid = jnp.sum(valid).astype(jnp.float32)
    lbl = jnp.where(valid, label, 0)
    probs = jax.nn.softmax(logits.astype(jnp.float32), axis=1)
    onehot = jax.nn.one_hot(lbl, logits.shape[1], axis=1, dtype=jnp.float32)
    pt = jnp.where(onehot == 1.0, probs, 1.0 - probs)
    alpha_t = alpha * onehot + (1.0 - alpha) * (1.0 - onehot)
    loss = -alpha_t * (1.0 - pt) ** gamma * jnp.log(pt + 1e-12)
    loss = loss * valid[:, None, :, :].astype(jnp.float32)
    return jnp.sum(loss) / n_valid


if __name__ == "__main__":
    key = jax.random.PRNGKey(0)
    k_logits, k_label = jax.random.split(key)

    N, C, H, W = 2, 4, 16, 16
    logits = jax.random.normal(k_logits, (N, C, H, W), dtype=jnp.float32)
    label = jax.random.randint(k_label, (N, H, W), 0, C, dtype=jnp.int32)
    # mark some pixels as ignored (255)
    label = label.at[0, 0, :].set(255)
    label = label.at[1, 3, 4:10].set(255)

    out = focal_loss_pallas(logits, label)
    out = jax.block_until_ready(out)

    ref = focal_loss_ref(logits, label)
    # slightly loose rtol: kernel uses the hardware approximate reciprocal
    # (pl.reciprocal(approx=True)) in the softmax denominator.
    assert jnp.allclose(out, ref, rtol=5e-3, atol=1e-5), (out, ref)

    print("KERNEL_OK")
</pallas_src>

<mosaic_0001>
module attributes {stable_mosaic.version = 11 : i64} {
  func.func @_focal_kernel(%arg0: i32, %arg1: i32, %arg2: memref<1x4x256xf32, #tpu.memory_space<vmem>>, %arg3: memref<1x1x256xi32, #tpu.memory_space<vmem>>, %arg4: memref<1x1x8x128xf32, #tpu.memory_space<vmem>>) attributes {dimension_semantics = [#tpu.dimension_semantics<parallel>, #tpu.dimension_semantics<parallel>], iteration_bounds = array<i64: 2, 1>, scalar_prefetch = 0 : i64, scratch_operands = 0 : i64, tpu.core_type = #tpu.core_type<tc>, window_params = [{transform_indices = @transform_0, window_bounds = array<i64: 1, 4, 256>}, {transform_indices = @transform_1, window_bounds = array<i64: 1, 1, 256>}, {transform_indices = @transform_2, window_bounds = array<i64: 1, 1, 8, 128>}]} {
    %c0 = arith.constant 0 : index
    %c0_0 = arith.constant 0 : index
    %c0_1 = arith.constant 0 : index
    %0 = vector.load %arg2[%c0, %c0_0, %c0_1] : memref<1x4x256xf32, #tpu.memory_space<vmem>>, vector<1x4x256xf32>
    %1 = vector.shape_cast %0 : vector<1x4x256xf32> to vector<4x256xf32>
    %c0_2 = arith.constant 0 : index
    %c0_3 = arith.constant 0 : index
    %c0_4 = arith.constant 0 : index
    %2 = vector.load %arg3[%c0_2, %c0_3, %c0_4] : memref<1x1x256xi32, #tpu.memory_space<vmem>>, vector<1x1x256xi32>
    %3 = vector.shape_cast %2 : vector<1x1x256xi32> to vector<1x256xi32>
    %c255_i32 = arith.constant 255 : i32
    %4 = vector.broadcast %c255_i32 : i32 to vector<1x256xi32>
    %5 = arith.cmpi ne, %3, %4 : vector<1x256xi32>
    %c0_i32 = arith.constant 0 : i32
    %6 = vector.broadcast %c0_i32 : i32 to vector<1x256xi32>
    %7 = arith.select %5, %3, %6 : vector<1x256xi1>, vector<1x256xi32>
    %cst = arith.constant dense<0xFF800000> : vector<256xf32>
    %8 = vector.multi_reduction <maximumf>, %1, %cst [0] : vector<4x256xf32> to vector<256xf32>
    %9 = vector.shape_cast %8 : vector<256xf32> to vector<1x256xf32>
    %10 = vector.broadcast %9 : vector<1x256xf32> to vector<4x256xf32>
    %11 = arith.subf %1, %10 : vector<4x256xf32>
    %12 = math.exp %11 : vector<4x256xf32>
    %cst_5 = arith.constant dense<0.000000e+00> : vector<256xf32>
    %13 = vector.multi_reduction <add>, %12, %cst_5 [0] : vector<4x256xf32> to vector<256xf32>
    %14 = vector.shape_cast %13 : vector<256xf32> to vector<1x256xf32>
    %15 = tpu.reciprocal %14 {approx = true} : vector<1x256xf32> -> vector<1x256xf32>
    %16 = vector.broadcast %15 : vector<1x256xf32> to vector<4x256xf32>
    %17 = arith.mulf %12, %16 : vector<4x256xf32>
    %18 = tpu.iota {dimensions = array<i32: 0>} : vector<4x256xi32>
    %19 = vector.broadcast %7 : vector<1x256xi32> to vector<4x256xi32>
    %20 = arith.cmpi eq, %18, %19 : vector<4x256xi32>
    %21 = arith.extui %20 : vector<4x256xi1> to vector<4x256xi32>
    %22 = arith.sitofp %21 : vector<4x256xi32> to vector<4x256xf32>
    %cst_6 = arith.constant 1.000000e+00 : f32
    %23 = vector.broadcast %cst_6 : f32 to vector<4x256xf32>
    %24 = arith.cmpf oeq, %22, %23 : vector<4x256xf32>
    %cst_7 = arith.constant 1.000000e+00 : f32
    %25 = vector.broadcast %cst_7 : f32 to vector<4x256xf32>
    %26 = arith.subf %25, %17 : vector<4x256xf32>
    %27 = arith.select %24, %17, %26 : vector<4x256xi1>, vector<4x256xf32>
    %cst_8 = arith.constant 2.500000e-01 : f32
    %28 = vector.broadcast %cst_8 : f32 to vector<4x256xf32>
    %29 = arith.mulf %28, %22 : vector<4x256xf32>
    %cst_9 = arith.constant 1.000000e+00 : f32
    %30 = vector.broadcast %cst_9 : f32 to vector<4x256xf32>
    %31 = arith.subf %30, %22 : vector<4x256xf32>
    %cst_10 = arith.constant 7.500000e-01 : f32
    %32 = vector.broadcast %cst_10 : f32 to vector<4x256xf32>
    %33 = arith.mulf %32, %31 : vector<4x256xf32>
    %34 = arith.addf %29, %33 : vector<4x256xf32>
    %cst_11 = arith.constant 0.000000e+00 : f32
    %35 = vector.broadcast %cst_11 : f32 to vector<4x256xf32>
    %36 = arith.subf %35, %34 : vector<4x256xf32>
    %cst_12 = arith.constant 1.000000e+00 : f32
    %37 = vector.broadcast %cst_12 : f32 to vector<4x256xf32>
    %38 = arith.subf %37, %27 : vector<4x256xf32>
    %39 = arith.mulf %38, %38 : vector<4x256xf32>
    %40 = arith.mulf %36, %39 : vector<4x256xf32>
    %cst_13 = arith.constant 9.99999996E-13 : f32
    %41 = vector.broadcast %cst_13 : f32 to vector<4x256xf32>
    %42 = arith.addf %27, %41 : vector<4x256xf32>
    %43 = math.log %42 : vector<4x256xf32>
    %44 = arith.mulf %40, %43 : vector<4x256xf32>
    %cst_14 = arith.constant 0.000000e+00 : f32
    %45 = vector.shape_cast %5 : vector<1x256xi1> to vector<1x256xi1>
    %46 = vector.broadcast %45 : vector<1x256xi1> to vector<4x256xi1>
    %47 = vector.broadcast %cst_14 : f32 to vector<4x256xf32>
    %48 = arith.select %46, %44, %47 : vector<4x256xi1>, vector<4x256xf32>
    %49 = vector.shape_cast %48 : vector<4x256xf32> to vector<1x4x256xf32>
    %cst_15 = arith.constant dense<0.000000e+00> : vector<1xf32>
    %50 = vector.multi_reduction <add>, %49, %cst_15 [1, 2] : vector<1x4x256xf32> to vector<1xf32>
    %51 = vector.shape_cast %50 : vector<1xf32> to vector<1x1x1xf32>
    %52 = vector.extract %51[0, 0, 0] : f32 from vector<1x1x1xf32>
    %53 = arith.extui %5 : vector<1x256xi1> to vector<1x256xi32>
    %54 = arith.sitofp %53 : vector<1x256xi32> to vector<1x256xf32>
    %55 = vector.shape_cast %54 : vector<1x256xf32> to vector<1x1x256xf32>
    %cst_16 = arith.constant dense<0.000000e+00> : vector<1xf32>
    %56 = vector.multi_reduction <add>, %55, %cst_16 [1, 2] : vector<1x1x256xf32> to vector<1xf32>
    %57 = vector.shape_cast %56 : vector<1xf32> to vector<1x1x1xf32>
    %58 = vector.extract %57[0, 0, 0] : f32 from vector<1x1x1xf32>
    %59 = tpu.iota {dimensions = array<i32: 0>} : vector<8x128xi32>
    %60 = tpu.iota {dimensions = array<i32: 1>} : vector<8x128xi32>
    %c0_i32_17 = arith.constant 0 : i32
    %61 = vector.broadcast %c0_i32_17 : i32 to vector<8x128xi32>
    %62 = arith.cmpi eq, %59, %61 : vector<8x128xi32>
    %c0_i32_18 = arith.constant 0 : i32
    %63 = vector.broadcast %c0_i32_18 : i32 to vector<8x128xi32>
    %64 = arith.cmpi eq, %60, %63 : vector<8x128xi32>
    %65 = arith.andi %62, %64 : vector<8x128xi1>
    %c0_i32_19 = arith.constant 0 : i32
    %66 = vector.broadcast %c0_i32_19 : i32 to vector<8x128xi32>
    %67 = arith.cmpi eq, %59, %66 : vector<8x128xi32>
    %c1_i32 = arith.constant 1 : i32
    %68 = vector.broadcast %c1_i32 : i32 to vector<8x128xi32>
    %69 = arith.cmpi eq, %60, %68 : vector<8x128xi32>
    %70 = arith.andi %67, %69 : vector<8x128xi1>
    %cst_20 = arith.constant 0.000000e+00 : f32
    %71 = vector.broadcast %58 : f32 to vector<8x128xf32>
    %72 = vector.broadcast %cst_20 : f32 to vector<8x128xf32>
    %73 = arith.select %70, %71, %72 : vector<8x128xi1>, vector<8x128xf32>
    %74 = vector.broadcast %52 : f32 to vector<8x128xf32>
    %75 = arith.select %65, %74, %73 : vector<8x128xi1>, vector<8x128xf32>
    %76 = vector.shape_cast %75 : vector<8x128xf32> to vector<1x1x8x128xf32>
    %c0_21 = arith.constant 0 : index
    %c0_22 = arith.constant 0 : index
    %c0_23 = arith.constant 0 : index
    %c0_24 = arith.constant 0 : index
    %77 = vector.load %arg4[%c0_21, %c0_22, %c0_23, %c0_24] : memref<1x1x8x128xf32, #tpu.memory_space<vmem>>, vector<1x1x8x128xf32>
    tpu.vector_store %arg4[%c0_21, %c0_22, %c0_23, %c0_24], %76 {strides = array<i32>} : memref<1x1x8x128xf32, #tpu.memory_space<vmem>>, vector<1x1x8x128xf32>,
    return
  }
  func.func @transform_0(%arg0: i32, %arg1: i32) -> (i32, i32, i32) {
    %c0_i32 = arith.constant 0 : i32
    %c0_i32_0 = arith.constant 0 : i32
    return %arg0, %c0_i32, %arg1 : i32, i32, i32
  }
  func.func @transform_1(%arg0: i32, %arg1: i32) -> (i32, i32, i32) {
    %c0_i32 = arith.constant 0 : i32
    %c0_i32_0 = arith.constant 0 : i32
    return %arg0, %c0_i32, %arg1 : i32, i32, i32
  }
  func.func @transform_2(%arg0: i32, %arg1: i32) -> (i32, i32, i32, i32) {
    %c0_i32 = arith.constant 0 : i32
    %c0_i32_0 = arith.constant 0 : i32
    %c0_i32_1 = arith.constant 0 : i32
    return %arg0, %arg1, %c0_i32, %c0_i32_0 : i32, i32, i32, i32
  }
}

</mosaic_0001>

<llo_original>
// kernel: tpu_custom_call.1
$region0: #{tpu_custom_call.1}
  #allocation0 [shape = 'u32[]', space=smem, size = 0x4, offset = 0x4, fixed_abs, tag = 'smem constant byte address 0x4 - core index']
  #allocation1 [shape = 'u32[144,128]{1,0:T(1,128)}', space=vmem, size = 0x12000, scoped, tag = 'internal scratch']
  %s0 = inlined_call_operand.hbm [shape: f32[2,4,256], index: 0, kind: input, shape index: {}]
  %s1 = inlined_call_operand.hbm [shape: s32[2,1,256], index: 1, kind: input, shape index: {}]
  %s2 = inlined_call_operand.hbm [shape: f32[2,1,8,128], index: 2, kind: output, shape index: {}]
  %s3 = sld [smem:[#allocation0]]
  $region49: #{tpu_custom_call.1} parent=0
    _
  %s5 = ssub.s32 1, %s3
  %s6 = scalar_select 0, %s5, %s3
  $region1: #{tpu_custom_call.1} parent=0
    #allocation2 [shape = 'u8[8192]{0}', space=vmem, size = 0x2000, scoped, tag = 'input window, operand 0']
    #allocation3 [shape = 's32[2]{0}', space=sflag, size = 0x8, scoped, tag = 'scoped memory for tpu_custom_call.1']
    #allocation4 [shape = 's32[2]{0}', space=sflag, size = 0x8, scoped, tag = 'scoped memory for tpu_custom_call.1']
    #allocation5 [shape = 'u8[2048]{0}', space=vmem, size = 0x800, scoped, tag = 'input window, operand 1']
    #allocation6 [shape = 's32[2]{0}', space=sflag, size = 0x8, scoped, tag = 'scoped memory for tpu_custom_call.1']
    #allocation7 [shape = 'u8[8192]{0}', space=vmem, size = 0x2000, scoped, tag = 'output window, operand 0']
    %7 = vsyncpa [#allocation3], 0
    %s8 = scalar_lea.sflag [#allocation3], 1
    %9 = vsyncpa %s8, 0
    %10 = vsyncpa [#allocation6], 0
    %s11 = scalar_lea.sflag [#allocation6], 1
    %12 = vsyncpa %s11, 0
    %13 = vsyncpa [#allocation4], 0
    %s14 = scalar_lea.sflag [#allocation4], 1
    %15 = vsyncpa %s14, 0
    loop: start=0, step=1, limit=4
    $region2: #{tpu_custom_call.1} parent=1 // loop_pre_header
      _
    $region3: #{tpu_custom_call.1} parent=1 // loop_header
      %s17 = sphi 0, %s21
      %p18 = scmp.ge.s32.totalorder %s17, 4
      %s24 = sphi 0, %s36
      %s25 = sphi 0, %s32
      %s26 = sphi 0, %s24
      %s27 = sphi 0, %s25
      %s28 = sphi 0, %s26
      %s29 = sphi 0, %s27
      %s41 = sphi 0, %s43
      %s44 = sphi 0, %s41
      %s45 = sphi 0, %s44
      %s61 = sphi 0, %s45
      %s69 = sphi 0, %s71
      %s72 = sphi 0, %s69
      %s73 = sphi 0, %s72
      %s89 = sphi 0, %s73
      %s97 = sphi 0, %s99
      %s100 = sphi 0, %s97
      %s101 = sphi 0, %s100
      %s117 = sphi 0, %s101
    $region4: #{tpu_custom_call.1} parent=1 // loop_header_branch
      %20 = sbr.rel (%p18) target = $region8
    $region5: #{tpu_custom_call.1} parent=1 // loop_body
      %s22 = ssub.s32 %s17, 1
      %s23 = ssub.s32 %s17, 2
      %s30 = sadd.s32 1, %s25
      %p31 = scmp.ge.s32.totalorder %s30, 1
      %s32 = scalar_select %p31, 0, %s30
      %s33 = sadd.s32 1, %s24
      %s34 = scalar_select %p31, %s33, %s24
      %p35 = scmp.ge.s32.totalorder %s34, 2
      %s36 = scalar_select %p35, 0, %s34
      %s37 = ssub.s32 %s24, %s36
      %s38 = ssub.s32 %s25, %s32
      %s39 = sor.u32 %s37, %s38
      %p40 = scmp.eq.s32.totalorder %s39, 0
      %s42 = sadd.s32 %s41, 1
      %s43 = scalar_select %p40, %s41, %s42
      %p46 = pneg %p40
      %p47 = scmp.eq.s32.totalorder %s17, 1
      %p48 = por %p46, %p47
      %p49 = scmp.ne.s32.totalorder %s41, %s44
      %p50 = scmp.eq.s32.totalorder %s17, 0
      %p51 = por %p49, %p50
      %p52 = scmp.ne.s32.totalorder %s41, %s44
      %p53 = scmp.eq.s32.totalorder %s22, 1
      %p54 = por %p52, %p53
      %p55 = scmp.ne.s32.totalorder %s44, %s45
      %p56 = scmp.eq.s32.totalorder %s22, 0
      %p57 = por %p55, %p56
      %p58 = scmp.ne.s32.totalorder %s44, %s45
      %p59 = scmp.eq.s32.totalorder %s23, 1
      %p60 = por %p58, %p59
      %p62 = scmp.ne.s32.totalorder %s45, %s61
      %p63 = scmp.eq.s32.totalorder %s23, 0
      %p64 = por %p62, %p63
      %s65 = ssub.s32 %s24, %s36
      %s66 = ssub.s32 %s25, %s32
      %s67 = sor.u32 %s65, %s66
      %p68 = scmp.eq.s32.totalorder %s67, 0
      %s70 = sadd.s32 %s69, 1
      %s71 = scalar_select %p68, %s69, %s70
      %p74 = pneg %p68
      %p75 = scmp.eq.s32.totalorder %s17, 1
      %p76 = por %p74, %p75
      %p77 = scmp.ne.s32.totalorder %s69, %s72
      %p78 = scmp.eq.s32.totalorder %s17, 0
      %p79 = por %p77, %p78
      %p80 = scmp.ne.s32.totalorder %s69, %s72
      %p81 = scmp.eq.s32.totalorder %s22, 1
      %p82 = por %p80, %p81
      %p83 = scmp.ne.s32.totalorder %s72, %s73
      %p84 = scmp.eq.s32.totalorder %s22, 0
      %p85 = por %p83, %p84
      %p86 = scmp.ne.s32.totalorder %s72, %s73
      %p87 = scmp.eq.s32.totalorder %s23, 1
      %p88 = por %p86, %p87
      %p90 = scmp.ne.s32.totalorder %s73, %s89
      %p91 = scmp.eq.s32.totalorder %s23, 0
      %p92 = por %p90, %p91
      %s93 = ssub.s32 %s24, %s36
      %s94 = ssub.s32 %s25, %s32
      %s95 = sor.u32 %s93, %s94
      %p96 = scmp.eq.s32.totalorder %s95, 0
      %s98 = sadd.s32 %s97, 1
      %s99 = scalar_select %p96, %s97, %s98
      %p102 = pneg %p96
      %p103 = scmp.eq.s32.totalorder %s17, 1
      %p104 = por %p102, %p103
      %p105 = scmp.ne.s32.totalorder %s97, %s100
      %p106 = scmp.eq.s32.totalorder %s17, 0
      %p107 = por %p105, %p106
      %p108 = scmp.ne.s32.totalorder %s97, %s100
      %p109 = scmp.eq.s32.totalorder %s22, 1
      %p110 = por %p108, %p109
      %p111 = scmp.ne.s32.totalorder %s100, %s101
      %p112 = scmp.eq.s32.totalorder %s22, 0
      %p113 = por %p111, %p112
      %p114 = scmp.ne.s32.totalorder %s100, %s101
      %p115 = scmp.eq.s32.totalorder %s23, 1
      %p116 = por %p114, %p115
      %p118 = scmp.ne.s32.totalorder %s101, %s117
      %p119 = scmp.eq.s32.totalorder %s23, 0
      %p120 = por %p118, %p119
      %p121 = scmp.le.s32.totalorder 1, %s17
      %p122 = scmp.lt.s32.totalorder %s17, 3
      %p123 = pnand %p121, %p122
      %p124 = pneg %p123
      // Predicated region
      $region9: #{tpu_custom_call.1} parent=5 // pred_check
        _
      $region10: #{tpu_custom_call.1} parent=5 // pred_check_branch
        %126 = sbr.rel (%p123) target = $region12
      $region11: #{tpu_custom_call.1} parent=5 // pred_region
        %s127 = ssub.s32 %s17, 1
      $region12: #{tpu_custom_call.1} parent=5 // pred_fallthru
        _
      %p128 = scmp.lt.s32.totalorder %s17, 2
      // Predicated region
      $region13: #{tpu_custom_call.1} parent=5 // pred_check
        %p129 = pneg %p128
      $region14: #{tpu_custom_call.1} parent=5 // pred_check_branch
        %131 = sbr.rel (%p129) target = $region16
      $region15: #{tpu_custom_call.1} parent=5 // pred_region
        // Predicated region
        $region17: #{tpu_custom_call.1} parent=15 // pred_check
          %p132 = pneg %p51
        $region18: #{tpu_custom_call.1} parent=15 // pred_check_branch
          %134 = sbr.rel (%p132) target = $region20
        $region19: #{tpu_custom_call.1} parent=15 // pred_region
          %s135 = sand.u32 %s41, 1
          %s136 = scalar_lea.sflag [#allocation3], %s135
          %s137 = sand.u32 %s41, 1
          %s138 = smul.addr %s137, 8
          %s139 = scalar_lea.vmem [#allocation2], %s138
          %s140 = smul.u32 2, %s25
          %s142 = ssub.s32 128, 128
          %143 = vsyncadd %s136, %s142
          %s144 = smul.addr %s24, 2
          %s145 = sadd.s32 %s140, %s144
          %s146 = smul.addr %s145, 64
          %s147 = scalar_lea.hbm %s0, %s146
          %s149 = sshll.u32 %s139, 4
          %s150 = int_to_ptr.vmem [resolvable:$true] %s149
          %152 = dma.hbm_to_vmem [thread:$0]  %s147, 128, %s150, %s136
        $region20: #{tpu_custom_call.1} parent=15 // pred_fallthru
          _
        // Predicated region
        $region21: #{tpu_custom_call.1} parent=15 // pred_check
          %p153 = pneg %p79
        $region22: #{tpu_custom_call.1} parent=15 // pred_check_branch
          %155 = sbr.rel (%p153) target = $region24
        $region23: #{tpu_custom_call.1} parent=15 // pred_region
          %s156 = sand.u32 %s69, 1
          %s157 = scalar_lea.sflag [#allocation6], %s156
          %s158 = sand.u32 %s69, 1
          %s159 = smul.addr %s158, 2
          %s160 = scalar_lea.vmem [#allocation5], %s159
          %s161 = smul.u32 2, %s25
          %s163 = ssub.s32 32, 32
          %164 = vsyncadd %s157, %s163
          %s165 = smul.addr %s24, 2
          %s166 = sadd.s32 %s161, %s165
          %s167 = smul.addr %s166, 16
          %s168 = scalar_lea.hbm %s1, %s167
          %s170 = sshll.u32 %s160, 4
          %s171 = int_to_ptr.vmem [resolvable:$true] %s170
          %173 = dma.hbm_to_vmem [thread:$0]  %s168, 32, %s171, %s157
        $region24: #{tpu_custom_call.1} parent=15 // pred_fallthru
          _
      $region16: #{tpu_custom_call.1} parent=5 // pred_fallthru
        _
      %p174 = scmp.le.s32.totalorder 1, %s17
      %p175 = scmp.lt.s32.totalorder %s17, 3
      %p176 = pnand %p174, %p175
      %p177 = pneg %p176
      // Predicated region
      $region25: #{tpu_custom_call.1} parent=5 // pred_check
        _
      $region26: #{tpu_custom_call.1} parent=5 // pred_check_branch
        %179 = sbr.rel (%p176) target = $region28
      $region27: #{tpu_custom_call.1} parent=5 // pred_region
        %s180 = ssub.s32 %s17, 1
        %s181 = sand.u32 %s44, 1
        %s182 = scalar_lea.sflag [#allocation3], %s181
        %s183 = sand.u32 %s44, 1
        %s184 = smul.addr %s183, 8
        %s185 = scalar_lea.vmem [#allocation2], %s184
        // Predicated region
        $region29: #{tpu_custom_call.1} parent=27 // pred_check
          %p186 = pneg %p57
        $region30: #{tpu_custom_call.1} parent=27 // pred_check_branch
          %188 = sbr.rel (%p186) target = $region32
        $region31: #{tpu_custom_call.1} parent=27 // pred_region
          %189 = dma.done %s182, 128
        $region32: #{tpu_custom_call.1} parent=27 // pred_fallthru
          _
        %s190 = sand.u32 %s72, 1
        %s191 = scalar_lea.sflag [#allocation6], %s190
        %s192 = sand.u32 %s72, 1
        %s193 = smul.addr %s192, 2
        %s194 = scalar_lea.vmem [#allocation5], %s193
        // Predicated region
        $region33: #{tpu_custom_call.1} parent=27 // pred_check
          %p195 = pneg %p85
        $region34: #{tpu_custom_call.1} parent=27 // pred_check_branch
          %197 = sbr.rel (%p195) target = $region36
        $region35: #{tpu_custom_call.1} parent=27 // pred_region
          %198 = dma.done %s191, 32
        $region36: #{tpu_custom_call.1} parent=27 // pred_fallthru
          _
        %s199 = sand.u32 %s44, 1
        %s200 = scalar_lea.sflag [#allocation3], %s199
        %s201 = sand.u32 %s44, 1
        %s202 = smul.addr %s201, 8
        %s203 = scalar_lea.vmem [#allocation2], %s202
        %p204 = pneg %p57
        %p205 = pneg %p54
        %s206 = sand.u32 %s72, 1
        %s207 = scalar_lea.sflag [#allocation6], %s206
        %s208 = sand.u32 %s72, 1
        %s209 = smul.addr %s208, 2
        %s210 = scalar_lea.vmem [#allocation5], %s209
        %p211 = pneg %p85
        %p212 = pneg %p82
        %p213 = pneg %p113
        %p214 = pneg %p110
        %s215 = sand.u32 %s100, 1
        %s216 = scalar_lea.sflag [#allocation4], %s215
        %s217 = sand.u32 %s100, 1
        %s218 = smul.addr %s217, 8
        %s219 = scalar_lea.vmem [#allocation7], %s218
        %s220 = smul.u32 2, %s27
        %s221 = smul.u32 2, %s27
        %v222 = vld [vmem:[%s185] sm:$0xff]
        %v223 = vld [vmem:[%s194] sm:$0x3]
        %vm224 = vcmp.ne.s32.totalorder %v223, 255
        %v225 = vsel %vm224, %v223, 0
        %v227 = vcombine.high %v222, %v222
        %vm229 = vcmask 1043456
        %v230 = vsel %vm229, %v222, -inf
        %v231 = vrot.slane %v230, 4
        %v232 = vmax.f32 %v230, %v231
        %v233 = vrot.slane %v232, 2
        %v234 = vmax.f32 %v232, %v233
        %v235 = vrot.slane %v234, 1
        %v236 = vmax.f32 %v234, %v235
        %v237 = vsel %vm229, %v227, -inf
        %v238 = vrot.slane %v237, 4
        %v239 = vmax.f32 %v237, %v238
        %v240 = vrot.slane %v239, 2
        %v241 = vmax.f32 %v239, %v240
        %v242 = vrot.slane %v241, 1
        %v243 = vmax.f32 %v241, %v242
        %v246 = vcombine.low %v236, %v243
        %v248 = vsub.f32 %v222, %v246
        %v249 = vmul.f32 %v248, 1.442695
        %v250 = vpow.pop %v249
        %v252 = vcombine.high %v250, %v250
        %v254 = vsel %vm229, %v250, 0.0
        %v255 = vrot.slane %v254, 4
        %v256 = vadd.f32 %v254, %v255
        %v257 = vrot.slane %v256, 2
        %v258 = vadd.f32 %v256, %v257
        %v259 = vrot.slane %v258, 1
        %v260 = vadd.f32 %v258, %v259
        %v261 = vsel %vm229, %v252, 0.0
        %v262 = vrot.slane %v261, 4
        %v263 = vadd.f32 %v261, %v262
        %v264 = vrot.slane %v263, 2
        %v265 = vadd.f32 %v263, %v264
        %v266 = vrot.slane %v265, 1
        %v267 = vadd.f32 %v265, %v266
        %v268 = vrcp.pop %v260
        %v269 = vrcp.pop %v267
        %v272 = vcombine.low %v268, %v269
        %v274 = vmul.f32 %v250, %v272
        %v275 = vlaneseq
        %v276 = vshrl.u32 %v275, 7
        %v277 = vlaneseq
        %v278 = vshrl.u32 %v277, 7
        %v279 = vsub.s32 0, %v278
        %v280 = vrot.slane %v225, %v279
        %v281 = vlaneseq
        %v282 = vshrl.u32 %v281, 7
        %v283 = vsub.s32 1, %v282
        %v284 = vrot.slane %v225, %v283
        %vm285 = vcmp.eq.s32.totalorder %v276, %v280
        %vm286 = vcmp.eq.s32.totalorder %v276, %v284
        %v287 = vsel %vm285, 1, 0
        %v288 = vsel %vm286, 1, 0
        %v289 = vcvt.s32.f32 %v287
        %v290 = vcvt.s32.f32 %v288
        %vm291 = vcmp.eq.f32.partialorder %v289, 1.0
        %vm292 = vcmp.eq.f32.partialorder %v290, 1.0
        %v293 = vsub.f32 1.0, %v274
        %v295 = vcombine.high %v274, %v274
        %v298 = vcombine.high %v293, %v293
        %v300 = vsel %vm291, %v274, %v293
        %v301 = vsel %vm292, %v295, %v298
        %v302 = vmul.f32 %v289, 0.25
        %v303 = vmul.f32 %v290, 0.25
        %v304 = vsub.f32 1.0, %v289
        %v305 = vsub.f32 1.0, %v290
        %v306 = vmul.f32 %v304, 0.75
        %v307 = vmul.f32 %v305, 0.75
        %v308 = vadd.f32 %v302, %v306
        %v309 = vadd.f32 %v303, %v307
        %v310 = vsub.f32 0.0, %v308
        %v311 = vsub.f32 0.0, %v309
        %v312 = vsub.f32 1.0, %v300
        %v313 = vsub.f32 1.0, %v301
        %v314 = vmul.f32 %v312, %v312
        %v315 = vmul.f32 %v313, %v313
        %v316 = vmul.f32 %v310, %v314
        %v317 = vmul.f32 %v311, %v315
        %v318 = vadd.f32 %v300, 1e-12
        %v319 = vadd.f32 %v301, 1e-12
        %v320 = vlog2.pop %v318
        %v321 = vmul.f32 %v320, 0.6931472
        %v322 = vlog2.pop %v319
        %v323 = vmul.f32 %v322, 0.6931472
        %v324 = vmul.f32 %v316, %v321
        %v325 = vmul.f32 %v317, %v323
        %v326 = vsel %vm224, 1, 0
        %v327 = vlaneseq
        %v328 = vshrl.u32 %v327, 7
        %v329 = vsub.s32 0, %v328
        %v330 = vrot.slane %v326, %v329
        %v331 = vlaneseq
        %v332 = vshrl.u32 %v331, 7
        %v333 = vsub.s32 1, %v332
        %v334 = vrot.slane %v326, %v333
        %vm335 = vcmp.eq.s32.totalorder %v330, 1
        %vm336 = vcmp.eq.s32.totalorder %v334, 1
        %v337 = vsel %vm335, %v324, 0.0
        %v338 = vsel %vm336, %v325, 0.0
        %v339 = vsel %vm229, %v337, 0.0
        %v340 = vsel %vm229, %v338, 0.0
        %v341 = vadd.f32 %v339, %v340
        %342 = vadd.xlane.f32.xlu0 %v341
        %v343 = vpop.xlane.xlu0 %342
        %v344 = vrot.slane %v343, 4
        %v345 = vadd.f32 %v343, %v344
        %v346 = vrot.slane %v345, 2
        %v347 = vadd.f32 %v345, %v346
        %v348 = vrot.slane %v347, 1
        %v349 = vadd.f32 %v347, %v348
        %s350 = vtos %v349
        %v351 = vcvt.s32.f32 %v326
        %v353 = vlaneseq
        %v354 = vshrl.u32 %v353, 7
        %v355 = vsub.s32 0, %v354
        %v356 = vrot.slane %v351, %v355
        %v357 = vlaneseq
        %v358 = vshrl.u32 %v357, 7
        %v359 = vsub.s32 1, %v358
        %v360 = vrot.slane %v351, %v359
        %vm363 = vcmask 1040384
        %v364 = vsel %vm363, %v356, 0.0
        %v365 = vsel %vm363, %v360, 0.0
        %v366 = vadd.f32 %v364, %v365
        %367 = vadd.xlane.f32.xlu0 %v366
        %v368 = vpop.xlane.xlu0 %367
        %v369 = vrot.slane %v368, 4
        %v370 = vadd.f32 %v368, %v369
        %v371 = vrot.slane %v370, 2
        %v372 = vadd.f32 %v370, %v371
        %v373 = vrot.slane %v372, 1
        %v374 = vadd.f32 %v372, %v373
        %s375 = vtos %v374
        %v376 = vlaneseq
        %v377 = vand.u32 %v376, 127
        %vm378 = vcmp.eq.s32.totalorder %v276, 0
        %vm379 = vcmp.eq.s32.totalorder %v377, 0
        %vm380 = vmand %vm378, %vm379
        %vm381 = vcmp.eq.s32.totalorder %v377, 1
        %vm382 = vmand %vm378, %vm381
        %v383 = vstv %s375
        %v384 = vsel %vm382, %v383, 0.0
        %v385 = vstv %s350
        %v386 = vsel %vm380, %v385, %v384
        %387 = vst [vmem:[%s219] sm:$0xff] %v386
        %s388 = sand.u32 %s100, 1
        %s389 = scalar_lea.sflag [#allocation4], %s388
        %s390 = sand.u32 %s100, 1
        %s391 = smul.addr %s390, 8
        %s392 = scalar_lea.vmem [#allocation7], %s391
        // Predicated region
        $region37: #{tpu_custom_call.1} parent=27 // pred_check
          %p393 = pneg %p110
        $region38: #{tpu_custom_call.1} parent=27 // pred_check_branch
          %395 = sbr.rel (%p393) target = $region40
        $region39: #{tpu_custom_call.1} parent=27 // pred_region
          %s397 = ssub.s32 128, 128
          %398 = vsyncadd %s389, %s397
          %s399 = sadd.s32 %s27, %s26
          %s400 = smul.addr %s399, 128
          %s401 = scalar_lea.hbm %s2, %s400
          %s403 = sshll.u32 %s392, 4
          %s404 = int_to_ptr.vmem [resolvable:$true] %s403
          %406 = dma.vmem_to_hbm [thread:$0]  %s404, 128, %s401, %s389
        $region40: #{tpu_custom_call.1} parent=27 // pred_fallthru
          _
      $region28: #{tpu_custom_call.1} parent=5 // pred_fallthru
        _
      %p407 = scmp.le.s32.totalorder 2, %s17
      // Predicated region
      $region41: #{tpu_custom_call.1} parent=5 // pred_check
        %p408 = pneg %p407
      $region42: #{tpu_custom_call.1} parent=5 // pred_check_branch
        %410 = sbr.rel (%p408) target = $region44
      $region43: #{tpu_custom_call.1} parent=5 // pred_region
        %s411 = ssub.s32 %s17, 2
        // Predicated region
        $region45: #{tpu_custom_call.1} parent=43 // pred_check
          %p412 = pneg %p116
        $region46: #{tpu_custom_call.1} parent=43 // pred_check_branch
          %414 = sbr.rel (%p412) target = $region48
        $region47: #{tpu_custom_call.1} parent=43 // pred_region
          %s415 = sand.u32 %s101, 1
          %s416 = scalar_lea.sflag [#allocation4], %s415
          %s417 = sand.u32 %s101, 1
          %s418 = smul.addr %s417, 8
          %s419 = scalar_lea.vmem [#allocation7], %s418
          %420 = dma.done %s416, 128
        $region48: #{tpu_custom_call.1} parent=43 // pred_fallthru
          _
      $region44: #{tpu_custom_call.1} parent=5 // pred_fallthru
        _
    $region6: #{tpu_custom_call.1} parent=1 // loop_footer
      %s21 = sadd.s32 1, %s17
    $region7: #{tpu_custom_call.1} parent=1 // loop_footer_branch
      %16 = sbr.rel target = $region3
    $region8: #{tpu_custom_call.1} parent=1 // loop_exit
      _
    %421 = vsyncpa [#allocation3], 1
    %s422 = scalar_lea.sflag [#allocation3], 1
    %423 = vsyncpa %s422, 1
    %424 = vsyncpa [#allocation6], 1
    %s425 = scalar_lea.sflag [#allocation6], 1
    %426 = vsyncpa %s425, 1
    %427 = vsyncpa [#allocation4], 1
    %s428 = scalar_lea.sflag [#allocation4], 1
    %429 = vsyncpa %s428, 1

</llo_original>
